<compile_context>
chip_gen: v7x
topology: tpu7x:2x2x1
jax: 0.10.0
libtpu: 0.0.40
codegen_flags: <defaults>
</compile_context>

<pallas_src>
import jax
import jax.numpy as jnp
from jax.experimental import pallas as pl
from jax.experimental.pallas import tpu as pltpu


def _round_up(n, m):
    return ((n + m - 1) // m) * m


def _make_kernel(inv_b, kld_const):
    """inv_b = 1/B (real batch), kld_const = B_pad * Z_pad (padding correction)."""

    def kernel(xr_ref, x_ref, mu_ref, lv_ref, out_ref, mse_acc, kld_acc):
        i = pl.program_id(0)
        nb = pl.num_programs(0)

        @pl.when(i == 0)
        def _init():
            mse_acc[...] = jnp.zeros_like(mse_acc)
            kld_acc[...] = jnp.zeros_like(kld_acc)

        # In-kernel upcast (no-op for f32 inputs, halves HBM bytes for bf16).
        xr = xr_ref[...].astype(jnp.float32)
        x = x_ref[...].astype(jnp.float32)
        diff = xr - x
        mse_part = jnp.sum(diff * diff)              # fused full 2-D reduce

        mu = mu_ref[...].astype(jnp.float32)
        lv = lv_ref[...].astype(jnp.float32)
        # "+1" per element folded out; corrected with kld_const at finalize.
        kld_part = jnp.sum(lv - mu * mu - jnp.exp(lv))

        mse_acc[...] += mse_part
        kld_acc[...] += kld_part

        @pl.when(i == nb - 1)
        def _finalize():
            loss_mse = mse_acc[...] * inv_b                              # (1,1)
            loss_kld = (kld_const + kld_acc[...]) * (-0.5 * inv_b)       # (1,1)
            loss_tot = loss_mse + loss_kld
            lane = jax.lax.broadcasted_iota(jnp.int32, (1, 128), 1)
            out_ref[...] = jnp.where(
                lane == 0, loss_mse,
                jnp.where(lane == 1, loss_kld, loss_tot))

    return kernel


def custom_loss(x_recon, x, mu, logvar, *, vmem_budget_bytes=10 * 1024 * 1024):
    """Returns (loss_MSE, loss_KLD, loss_MSE + loss_KLD) as f32 scalars."""
    assert x_recon.ndim == 2 and x_recon.shape == x.shape
    assert mu.ndim == 2 and mu.shape == logvar.shape
    assert x_recon.shape[0] == mu.shape[0]

    B, D = x.shape
    _, Z = mu.shape

    # Lane-dense padding of the feature dims.
    D_pad = _round_up(D, 128)
    Z_pad = _round_up(Z, 128)

    itemsize = jnp.dtype(x.dtype).itemsize
    # 4 input tiles per step, double-buffered.
    per_row_bytes = 2 * (2 * D_pad + 2 * Z_pad) * itemsize
    tb = max(8, min(1024, (vmem_budget_bytes // per_row_bytes) // 8 * 8))
    tb = min(tb, _round_up(B, 8))
    B_pad = _round_up(B, tb)
    nb = B_pad // tb

    def pad2(a, rows, cols):
        return jnp.pad(a, ((0, rows - a.shape[0]), (0, cols - a.shape[1])))

    xr_p = pad2(x_recon, B_pad, D_pad)
    x_p = pad2(x, B_pad, D_pad)
    mu_p = pad2(mu, B_pad, Z_pad)
    lv_p = pad2(logvar, B_pad, Z_pad)

    # Padded (mu=0, logvar=0) entries contribute exactly -1 each to
    # sum(lv - mu^2 - exp(lv)); adding B_pad*Z_pad recovers the exact
    # sum over real entries of (1 + lv - mu^2 - exp(lv)).
    kld_const = float(B_pad * Z_pad)
    inv_b = 1.0 / float(B)

    kernel = _make_kernel(inv_b, kld_const)

    cost = pl.CostEstimate(
        flops=int(3 * B_pad * D_pad + 6 * B_pad * Z_pad),
        transcendentals=int(B_pad * Z_pad),
        bytes_accessed=int(
            2 * B_pad * D_pad * itemsize + 2 * B_pad * Z_pad * itemsize + 128 * 4),
    )

    out = pl.pallas_call(
        kernel,
        out_shape=jax.ShapeDtypeStruct((1, 128), jnp.float32),
        grid_spec=pltpu.PrefetchScalarGridSpec(
            num_scalar_prefetch=0,
            grid=(nb,),
            in_specs=[
                pl.BlockSpec((tb, D_pad), lambda i: (i, 0)),
                pl.BlockSpec((tb, D_pad), lambda i: (i, 0)),
                pl.BlockSpec((tb, Z_pad), lambda i: (i, 0)),
                pl.BlockSpec((tb, Z_pad), lambda i: (i, 0)),
            ],
            out_specs=pl.BlockSpec((1, 128), lambda i: (0, 0)),
            scratch_shapes=[
                pltpu.VMEM((1, 1), jnp.float32),
                pltpu.VMEM((1, 1), jnp.float32),
            ],
        ),
        compiler_params=pltpu.CompilerParams(
            dimension_semantics=("arbitrary",),
            vmem_limit_bytes=32 * 1024 * 1024,
        ),
        cost_estimate=cost,
    )(xr_p, x_p, mu_p, lv_p)

    return out[0, 0], out[0, 1], out[0, 2]


def _reference(x_recon, x, mu, logvar):
    xr = x_recon.astype(jnp.float32)
    xf = x.astype(jnp.float32)
    muf = mu.astype(jnp.float32)
    lvf = logvar.astype(jnp.float32)
    loss_mse = jnp.mean(jnp.sum((xr - xf) ** 2, axis=1))
    loss_kld = jnp.mean(
        -0.5 * jnp.sum(1.0 + lvf - muf ** 2 - jnp.exp(lvf), axis=1))
    return loss_mse, loss_kld, loss_mse + loss_kld


if __name__ == "__main__":
    key = jax.random.PRNGKey(0)

    # ---- Test 1: module's nominal shapes (already lane/sublane aligned) ----
    B, D, Z = 8, 128, 32
    k1, k2, k3, k4 = jax.random.split(key, 4)
    x_recon = jax.random.normal(k1, (B, D), dtype=jnp.float32)
    x = jax.random.normal(k2, (B, D), dtype=jnp.float32)
    mu = jax.random.normal(k3, (B, Z), dtype=jnp.float32) * 0.5
    logvar = jax.random.normal(k4, (B, Z), dtype=jnp.float32) * 0.1

    mse, kld, tot = custom_loss(x_recon, x, mu, logvar)
    jax.block_until_ready((mse, kld, tot))
    r_mse, r_kld, r_tot = _reference(x_recon, x, mu, logvar)
    assert jnp.allclose(mse, r_mse, rtol=1e-5, atol=1e-4), (mse, r_mse)
    assert jnp.allclose(kld, r_kld, rtol=1e-5, atol=1e-4), (kld, r_kld)
    assert jnp.allclose(tot, r_tot, rtol=1e-5, atol=1e-4), (tot, r_tot)

    # ---- Test 2: unaligned shapes + multi-step batch grid (tiny VMEM budget
    #      forces tb=8 so the accumulator runs over several grid steps) ----
    B2, D2, Z2 = 64, 200, 96
    k5, k6, k7, k8 = jax.random.split(jax.random.PRNGKey(1), 4)
    x_recon2 = jax.random.normal(k5, (B2, D2), dtype=jnp.float32)
    x2 = jax.random.normal(k6, (B2, D2), dtype=jnp.float32)
    mu2 = jax.random.normal(k7, (B2, Z2), dtype=jnp.float32) * 0.5
    logvar2 = jax.random.normal(k8, (B2, Z2), dtype=jnp.float32) * 0.1

    mse2, kld2, tot2 = custom_loss(
        x_recon2, x2, mu2, logvar2, vmem_budget_bytes=64 * 1024)
    jax.block_until_ready((mse2, kld2, tot2))
    r_mse2, r_kld2, r_tot2 = _reference(x_recon2, x2, mu2, logvar2)
    assert jnp.allclose(mse2, r_mse2, rtol=1e-5, atol=1e-3), (mse2, r_mse2)
    assert jnp.allclose(kld2, r_kld2, rtol=1e-5, atol=1e-3), (kld2, r_kld2)
    assert jnp.allclose(tot2, r_tot2, rtol=1e-5, atol=1e-3), (tot2, r_tot2)

    print("KERNEL_OK")
</pallas_src>

<mosaic_0001>
module attributes {stable_mosaic.version = 11 : i64} {
  func.func @kernel(%arg0: i32, %arg1: memref<8x128xf32, #tpu.memory_space<vmem>>, %arg2: memref<8x128xf32, #tpu.memory_space<vmem>>, %arg3: memref<8x128xf32, #tpu.memory_space<vmem>>, %arg4: memref<8x128xf32, #tpu.memory_space<vmem>>, %arg5: memref<1x128xf32, #tpu.memory_space<vmem>>, %arg6: memref<1x1xf32, #tpu.memory_space<vmem>>, %arg7: memref<1x1xf32, #tpu.memory_space<vmem>>) attributes {dimension_semantics = [#tpu.dimension_semantics<arbitrary>], iteration_bounds = array<i64: 1>, scalar_prefetch = 0 : i64, scratch_operands = 2 : i64, tpu.core_type = #tpu.core_type<tc>, window_params = [{transform_indices = @transform_0, window_bounds = array<i64: 8, 128>}, {transform_indices = @transform_1, window_bounds = array<i64: 8, 128>}, {transform_indices = @transform_2, window_bounds = array<i64: 8, 128>}, {transform_indices = @transform_3, window_bounds = array<i64: 8, 128>}, {pipeline_mode = #tpu.pipeline_mode<synchronous>, transform_indices = @transform_4, window_bounds = array<i64: 1, 128>}]} {
    %c0_i32 = arith.constant 0 : i32
    %0 = arith.cmpi eq, %arg0, %c0_i32 : i32
    %1 = arith.extui %0 : i1 to i32
    %c0_i32_0 = arith.constant 0 : i32
    %2 = arith.cmpi ne, %1, %c0_i32_0 : i32
    scf.if %2 {
      %cst_19 = arith.constant 0.000000e+00 : f32
      %32 = vector.broadcast %cst_19 : f32 to vector<1x1xf32>
      %c0_20 = arith.constant 0 : index
      %c0_21 = arith.constant 0 : index
      %33 = vector.load %arg6[%c0_20, %c0_21] : memref<1x1xf32, #tpu.memory_space<vmem>>, vector<1x1xf32>
      tpu.vector_store %arg6[%c0_20, %c0_21], %32 {strides = array<i32>} : memref<1x1xf32, #tpu.memory_space<vmem>>, vector<1x1xf32>,
      %cst_22 = arith.constant 0.000000e+00 : f32
      %34 = vector.broadcast %cst_22 : f32 to vector<1x1xf32>
      %c0_23 = arith.constant 0 : index
      %c0_24 = arith.constant 0 : index
      %35 = vector.load %arg7[%c0_23, %c0_24] : memref<1x1xf32, #tpu.memory_space<vmem>>, vector<1x1xf32>
      tpu.vector_store %arg7[%c0_23, %c0_24], %34 {strides = array<i32>} : memref<1x1xf32, #tpu.memory_space<vmem>>, vector<1x1xf32>,
    } else {
    }
    %c0 = arith.constant 0 : index
    %c0_1 = arith.constant 0 : index
    %3 = vector.load %arg1[%c0, %c0_1] : memref<8x128xf32, #tpu.memory_space<vmem>>, vector<8x128xf32>
    %c0_2 = arith.constant 0 : index
    %c0_3 = arith.constant 0 : index
    %4 = vector.load %arg2[%c0_2, %c0_3] : memref<8x128xf32, #tpu.memory_space<vmem>>, vector<8x128xf32>
    %5 = arith.subf %3, %4 : vector<8x128xf32>
    %6 = arith.mulf %5, %5 : vector<8x128xf32>
    %7 = vector.shape_cast %6 : vector<8x128xf32> to vector<1x8x128xf32>
    %cst = arith.constant dense<0.000000e+00> : vector<1xf32>
    %8 = vector.multi_reduction <add>, %7, %cst [1, 2] : vector<1x8x128xf32> to vector<1xf32>
    %9 = vector.shape_cast %8 : vector<1xf32> to vector<1x1x1xf32>
    %10 = vector.extract %9[0, 0, 0] : f32 from vector<1x1x1xf32>
    %c0_4 = arith.constant 0 : index
    %c0_5 = arith.constant 0 : index
    %11 = vector.load %arg3[%c0_4, %c0_5] : memref<8x128xf32, #tpu.memory_space<vmem>>, vector<8x128xf32>
    %c0_6 = arith.constant 0 : index
    %c0_7 = arith.constant 0 : index
    %12 = vector.load %arg4[%c0_6, %c0_7] : memref<8x128xf32, #tpu.memory_space<vmem>>, vector<8x128xf32>
    %13 = arith.mulf %11, %11 : vector<8x128xf32>
    %14 = arith.subf %12, %13 : vector<8x128xf32>
    %15 = math.exp %12 : vector<8x128xf32>
    %16 = arith.subf %14, %15 : vector<8x128xf32>
    %17 = vector.shape_cast %16 : vector<8x128xf32> to vector<1x8x128xf32>
    %cst_8 = arith.constant dense<0.000000e+00> : vector<1xf32>
    %18 = vector.multi_reduction <add>, %17, %cst_8 [1, 2] : vector<1x8x128xf32> to vector<1xf32>
    %19 = vector.shape_cast %18 : vector<1xf32> to vector<1x1x1xf32>
    %20 = vector.extract %19[0, 0, 0] : f32 from vector<1x1x1xf32>
    %c0_9 = arith.constant 0 : index
    %c0_10 = arith.constant 0 : index
    %21 = vector.load %arg6[%c0_9, %c0_10] : memref<1x1xf32, #tpu.memory_space<vmem>>, vector<1x1xf32>
    %22 = vector.broadcast %10 : f32 to vector<1x1xf32>
    %23 = arith.addf %21, %22 : vector<1x1xf32>
    %c0_11 = arith.constant 0 : index
    %c0_12 = arith.constant 0 : index
    %24 = vector.load %arg6[%c0_11, %c0_12] : memref<1x1xf32, #tpu.memory_space<vmem>>, vector<1x1xf32>
    tpu.vector_store %arg6[%c0_11, %c0_12], %23 {strides = array<i32>} : memref<1x1xf32, #tpu.memory_space<vmem>>, vector<1x1xf32>,
    %c0_13 = arith.constant 0 : index
    %c0_14 = arith.constant 0 : index
    %25 = vector.load %arg7[%c0_13, %c0_14] : memref<1x1xf32, #tpu.memory_space<vmem>>, vector<1x1xf32>
    %26 = vector.broadcast %20 : f32 to vector<1x1xf32>
    %27 = arith.addf %25, %26 : vector<1x1xf32>
    %c0_15 = arith.constant 0 : index
    %c0_16 = arith.constant 0 : index
    %28 = vector.load %arg7[%c0_15, %c0_16] : memref<1x1xf32, #tpu.memory_space<vmem>>, vector<1x1xf32>
    tpu.vector_store %arg7[%c0_15, %c0_16], %27 {strides = array<i32>} : memref<1x1xf32, #tpu.memory_space<vmem>>, vector<1x1xf32>,
    %c0_i32_17 = arith.constant 0 : i32
    %29 = arith.cmpi eq, %arg0, %c0_i32_17 : i32
    %30 = arith.extui %29 : i1 to i32
    %c0_i32_18 = arith.constant 0 : i32
    %31 = arith.cmpi ne, %30, %c0_i32_18 : i32
    scf.if %31 {
      %c0_19 = arith.constant 0 : index
      %c0_20 = arith.constant 0 : index
      %32 = vector.load %arg6[%c0_19, %c0_20] : memref<1x1xf32, #tpu.memory_space<vmem>>, vector<1x1xf32>
      %cst_21 = arith.constant 1.250000e-01 : f32
      %33 = vector.broadcast %cst_21 : f32 to vector<1x1xf32>
      %34 = arith.mulf %32, %33 : vector<1x1xf32>
      %c0_22 = arith.constant 0 : index
      %c0_23 = arith.constant 0 : index
      %35 = vector.load %arg7[%c0_22, %c0_23] : memref<1x1xf32, #tpu.memory_space<vmem>>, vector<1x1xf32>
      %cst_24 = arith.constant 1.024000e+03 : f32
      %36 = vector.broadcast %cst_24 : f32 to vector<1x1xf32>
      %37 = arith.addf %36, %35 : vector<1x1xf32>
      %cst_25 = arith.constant -6.250000e-02 : f32
      %38 = vector.broadcast %cst_25 : f32 to vector<1x1xf32>
      %39 = arith.mulf %37, %38 : vector<1x1xf32>
      %40 = arith.addf %34, %39 : vector<1x1xf32>
      %41 = tpu.iota {dimensions = array<i32: 1>} : vector<1x128xi32>
      %c0_i32_26 = arith.constant 0 : i32
      %42 = vector.broadcast %c0_i32_26 : i32 to vector<1x128xi32>
      %43 = arith.cmpi eq, %41, %42 : vector<1x128xi32>
      %c1_i32 = arith.constant 1 : i32
      %44 = vector.broadcast %c1_i32 : i32 to vector<1x128xi32>
      %45 = arith.cmpi eq, %41, %44 : vector<1x128xi32>
      %46 = vector.shape_cast %39 : vector<1x1xf32> to vector<1x1xf32>
      %47 = vector.broadcast %46 : vector<1x1xf32> to vector<1x128xf32>
      %48 = vector.shape_cast %40 : vector<1x1xf32> to vector<1x1xf32>
      %49 = vector.broadcast %48 : vector<1x1xf32> to vector<1x128xf32>
      %50 = arith.select %45, %47, %49 : vector<1x128xi1>, vector<1x128xf32>
      %51 = vector.shape_cast %34 : vector<1x1xf32> to vector<1x1xf32>
      %52 = vector.broadcast %51 : vector<1x1xf32> to vector<1x128xf32>
      %53 = arith.select %43, %52, %50 : vector<1x128xi1>, vector<1x128xf32>
      %c0_27 = arith.constant 0 : index
      %c0_28 = arith.constant 0 : index
      %54 = vector.load %arg5[%c0_27, %c0_28] : memref<1x128xf32, #tpu.memory_space<vmem>>, vector<1x128xf32>
      tpu.vector_store %arg5[%c0_27, %c0_28], %53 {strides = array<i32>} : memref<1x128xf32, #tpu.memory_space<vmem>>, vector<1x128xf32>,
    } else {
    }
    return
  }
  func.func @transform_0(%arg0: i32) -> (i32, i32) {
    %c0_i32 = arith.constant 0 : i32
    %c0_i32_0 = arith.constant 0 : i32
    return %arg0, %c0_i32 : i32, i32
  }
  func.func @transform_1(%arg0: i32) -> (i32, i32) {
    %c0_i32 = arith.constant 0 : i32
    %c0_i32_0 = arith.constant 0 : i32
    return %arg0, %c0_i32 : i32, i32
  }
  func.func @transform_2(%arg0: i32) -> (i32, i32) {
    %c0_i32 = arith.constant 0 : i32
    %c0_i32_0 = arith.constant 0 : i32
    return %arg0, %c0_i32 : i32, i32
  }
  func.func @transform_3(%arg0: i32) -> (i32, i32) {
    %c0_i32 = arith.constant 0 : i32
    %c0_i32_0 = arith.constant 0 : i32
    return %arg0, %c0_i32 : i32, i32
  }
  func.func @transform_4(%arg0: i32) -> (i32, i32) {
    %c0_i32 = arith.constant 0 : i32
    %c0_i32_0 = arith.constant 0 : i32
    %c0_i32_1 = arith.constant 0 : i32
    return %c0_i32, %c0_i32_0 : i32, i32
  }
}

</mosaic_0001>

<llo_original>
// kernel: tpu_custom_call.1
$region0: #{tpu_custom_call.1}
  #allocation0 [shape = 'u32[]', space=smem, size = 0x4, offset = 0x4, fixed_abs, tag = 'smem constant byte address 0x4 - core index']
  #allocation1 [shape = 'u32[144,128]{1,0:T(1,128)}', space=vmem, size = 0x12000, scoped, tag = 'internal scratch']
  #allocation2 [shape = 'f32[1,1]{1,0:T(1,128)}', space=vmem, size = 0x200, scoped, tag = 'scratch operand']
  #allocation3 [shape = 'f32[1,1]{1,0:T(1,128)}', space=vmem, size = 0x200, scoped, tag = 'scratch operand']
  %s0 = inlined_call_operand.hbm [shape: f32[8,128], index: 0, kind: input, shape index: {}]
  %s1 = inlined_call_operand.hbm [shape: f32[8,128], index: 1, kind: input, shape index: {}]
  %s2 = inlined_call_operand.hbm [shape: f32[8,128], index: 2, kind: input, shape index: {}]
  %s3 = inlined_call_operand.vmem [shape: f32[8,128], index: 3, kind: input, shape index: {}]
  %s4 = inlined_call_operand.hbm [shape: f32[1,128], index: 4, kind: output, shape index: {}]
  %s5 = sld [smem:[#allocation0]]
  $region46: #{tpu_custom_call.1} parent=0
    _
  %s7 = ssub.s32 1, %s5
  %s8 = scalar_select 0, %s7, %s5
  $region1: #{tpu_custom_call.1} parent=0
    #allocation4 [shape = 'u8[4096]{0}', space=vmem, size = 0x1000, scoped, tag = 'input window, operand 0, single buffered']
    #allocation5 [shape = 's32[1]{0}', space=sflag, size = 0x4, scoped, tag = 'scoped memory for tpu_custom_call.1']
    #allocation6 [shape = 's32[1]{0}', space=sflag, size = 0x4, scoped, tag = 'scoped memory for tpu_custom_call.1']
    #allocation7 [shape = 'u8[4096]{0}', space=vmem, size = 0x1000, scoped, tag = 'input window, operand 1, single buffered']
    #allocation8 [shape = 's32[1]{0}', space=sflag, size = 0x4, scoped, tag = 'scoped memory for tpu_custom_call.1']
    #allocation9 [shape = 'u8[4096]{0}', space=vmem, size = 0x1000, scoped, tag = 'input window, operand 2, single buffered']
    #allocation10 [shape = 'u8[512]{0}', space=vmem, size = 0x400, scoped, tag = 'output window, operand 0, single buffered']
    %9 = vsyncpa [#allocation5], 0
    %10 = vsyncpa [#allocation8], 0
    %11 = vsyncpa [#allocation6], 0
    // Predicated region
    $region2: #{tpu_custom_call.1} parent=1 // pred_check
      _
    $region3: #{tpu_custom_call.1} parent=1 // pred_check_branch
      %13 = sbr.rel (0) target = $region5
    $region4: #{tpu_custom_call.1} parent=1 // pred_region
      %s15 = ssub.s32 128, 128
      %16 = vsyncadd [#allocation5], %s15
      %s18 = sshll.u32 [#allocation4], 4
      %s19 = int_to_ptr.vmem [resolvable:$true] %s18
      %21 = dma.hbm_to_vmem [thread:$0]  %s0, 128, %s19, [#allocation5]
    $region5: #{tpu_custom_call.1} parent=1 // pred_fallthru
      _
    // Predicated region
    $region6: #{tpu_custom_call.1} parent=1 // pred_check
      _
    $region7: #{tpu_custom_call.1} parent=1 // pred_check_branch
      %23 = sbr.rel (0) target = $region9
    $region8: #{tpu_custom_call.1} parent=1 // pred_region
      %s25 = ssub.s32 128, 128
      %26 = vsyncadd [#allocation8], %s25
      %s28 = sshll.u32 [#allocation7], 4
      %s29 = int_to_ptr.vmem [resolvable:$true] %s28
      %31 = dma.hbm_to_vmem [thread:$0]  %s1, 128, %s29, [#allocation8]
    $region9: #{tpu_custom_call.1} parent=1 // pred_fallthru
      _
    // Predicated region
    $region10: #{tpu_custom_call.1} parent=1 // pred_check
      _
    $region11: #{tpu_custom_call.1} parent=1 // pred_check_branch
      %33 = sbr.rel (0) target = $region13
    $region12: #{tpu_custom_call.1} parent=1 // pred_region
      %s35 = ssub.s32 128, 128
      %36 = vsyncadd [#allocation8], %s35
      %s38 = sshll.u32 [#allocation9], 4
      %s39 = int_to_ptr.vmem [resolvable:$true] %s38
      %41 = dma.hbm_to_vmem [thread:$0]  %s2, 128, %s39, [#allocation8]
    $region13: #{tpu_custom_call.1} parent=1 // pred_fallthru
      _
    // Predicated region
    $region14: #{tpu_custom_call.1} parent=1 // pred_check
      _
    $region15: #{tpu_custom_call.1} parent=1 // pred_check_branch
      %43 = sbr.rel (0) target = $region17
    $region16: #{tpu_custom_call.1} parent=1 // pred_region
      _
    $region17: #{tpu_custom_call.1} parent=1 // pred_fallthru
      _
    // Predicated region
    $region18: #{tpu_custom_call.1} parent=1 // pred_check
      _
    $region19: #{tpu_custom_call.1} parent=1 // pred_check_branch
      %45 = sbr.rel (0) target = $region21
    $region20: #{tpu_custom_call.1} parent=1 // pred_region
      %46 = dma.done [#allocation5], 128
    $region21: #{tpu_custom_call.1} parent=1 // pred_fallthru
      _
    // Predicated region
    $region22: #{tpu_custom_call.1} parent=1 // pred_check
      _
    $region23: #{tpu_custom_call.1} parent=1 // pred_check_branch
      %48 = sbr.rel (0) target = $region25
    $region24: #{tpu_custom_call.1} parent=1 // pred_region
      %49 = dma.done [#allocation8], 128
    $region25: #{tpu_custom_call.1} parent=1 // pred_fallthru
      _
    // Predicated region
    $region26: #{tpu_custom_call.1} parent=1 // pred_check
      _
    $region27: #{tpu_custom_call.1} parent=1 // pred_check_branch
      %51 = sbr.rel (0) target = $region29
    $region28: #{tpu_custom_call.1} parent=1 // pred_region
      %52 = dma.done [#allocation8], 128
    $region29: #{tpu_custom_call.1} parent=1 // pred_fallthru
      _
    %p53 = scmp.eq.s32.totalorder 0, 0
    // Predicated region
    $region30: #{tpu_custom_call.1} parent=1 // pred_check
      %p54 = pneg %p53
    $region31: #{tpu_custom_call.1} parent=1 // pred_check_branch
      %56 = sbr.rel (%p54) target = $region33
    $region32: #{tpu_custom_call.1} parent=1 // pred_region
      %vm57 = vcmask 0
      %58 = vst.msk [vmem:[#allocation2] sm:$0x1] %vm57, 0.0
      %59 = vst.msk [vmem:[#allocation3] sm:$0x1] %vm57, 0.0
    $region33: #{tpu_custom_call.1} parent=1 // pred_fallthru
      _
    %v60 = vld [vmem:[#allocation4] sm:$0xff]
    %v61 = vld [vmem:[#allocation7] sm:$0xff]
    %v62 = vsub.f32 %v60, %v61
    %v63 = vmul.f32 %v62, %v62
    %64 = vadd.xlane.f32.xlu0 %v63
    %v65 = vpop.xlane.xlu0 %64
    %v66 = vrot.slane %v65, 4
    %v67 = vadd.f32 %v65, %v66
    %v68 = vrot.slane %v67, 2
    %v69 = vadd.f32 %v67, %v68
    %v70 = vrot.slane %v69, 1
    %v71 = vadd.f32 %v69, %v70
    %s72 = vtos %v71
    %v73 = vld [vmem:[#allocation9] sm:$0xff]
    %v74 = vld [vmem:[%s3] sm:$0xff]
    %v75 = vmul.f32 %v73, %v73
    %v76 = vsub.f32 %v74, %v75
    %v77 = vmul.f32 %v74, 1.442695
    %v78 = vpow.pop %v77
    %v79 = vsub.f32 %v76, %v78
    %80 = vadd.xlane.f32.xlu0 %v79
    %v81 = vpop.xlane.xlu0 %80
    %v82 = vrot.slane %v81, 4
    %v83 = vadd.f32 %v81, %v82
    %v84 = vrot.slane %v83, 2
    %v85 = vadd.f32 %v83, %v84
    %v86 = vrot.slane %v85, 1
    %v87 = vadd.f32 %v85, %v86
    %s88 = vtos %v87
    %v89 = vld [vmem:[#allocation2] sm:$0x1]
    %v90 = vstv %s72
    %v91 = vadd.f32 %v89, %v90
    %vm92 = vcmask 0
    %93 = vst.msk [vmem:[#allocation2] sm:$0x1] %vm92, %v91
    %v94 = vld [vmem:[#allocation3] sm:$0x1]
    %v95 = vstv %s88
    %v96 = vadd.f32 %v94, %v95
    %97 = vst.msk [vmem:[#allocation3] sm:$0x1] %vm92, %v96
    // Predicated region
    $region34: #{tpu_custom_call.1} parent=1 // pred_check
      %p98 = pneg %p53
    $region35: #{tpu_custom_call.1} parent=1 // pred_check_branch
      %100 = sbr.rel (%p98) target = $region37
    $region36: #{tpu_custom_call.1} parent=1 // pred_region
      %v101 = vld [vmem:[#allocation2] sm:$0x1]
      %v102 = vmul.f32 %v101, 0.125
      %v103 = vld [vmem:[#allocation3] sm:$0x1]
      %v104 = vadd.f32 %v103, 1024.0
      %v105 = vmul.f32 %v104, -0.0625
      %v106 = vadd.f32 %v102, %v105
      %v107 = vlaneseq
      %v108 = vand.u32 %v107, 127
      %vm109 = vcmp.eq.s32.totalorder %v108, 0
      %vm110 = vcmp.eq.s32.totalorder %v108, 1
      %112 = vset.pattern.permute.xlu0 0
      %113 = vperm.xlu0 %112, %v105
      %v114 = vpop.permute.xlu0 %113
      %v116 = vlaneseq
      %v117 = vshrl.u32 %v116, 7
      %v118 = vsub.s32 0, %v117
      %v119 = vrot.slane %v114, %v118
      %121 = vset.pattern.permute.xlu0 0
      %122 = vperm.xlu0 %121, %v106
      %v123 = vpop.permute.xlu0 %122
      %v125 = vlaneseq
      %v126 = vshrl.u32 %v125, 7
      %v127 = vsub.s32 0, %v126
      %v128 = vrot.slane %v123, %v127
      %v129 = vsel %vm110, %v119, %v128
      %131 = vset.pattern.permute.xlu0 0
      %132 = vperm.xlu0 %131, %v102
      %v133 = vpop.permute.xlu0 %132
      %v135 = vlaneseq
      %v136 = vshrl.u32 %v135, 7
      %v137 = vsub.s32 0, %v136
      %v138 = vrot.slane %v133, %v137
      %v139 = vsel %vm109, %v138, %v129
      %140 = vst [vmem:[#allocation10] sm:$0x1] %v139
    $region37: #{tpu_custom_call.1} parent=1 // pred_fallthru
      _
    // Predicated region
    $region38: #{tpu_custom_call.1} parent=1 // pred_check
      _
    $region39: #{tpu_custom_call.1} parent=1 // pred_check_branch
      %142 = sbr.rel (0) target = $region41
    $region40: #{tpu_custom_call.1} parent=1 // pred_region
      %s144 = ssub.s32 16, 16
      %145 = vsyncadd [#allocation6], %s144
      %s147 = sshll.u32 [#allocation10], 4
      %s148 = int_to_ptr.vmem [resolvable:$true] %s147
      %150 = dma.vmem_to_hbm [thread:$0]  %s148, 16, %s4, [#allocation6]
    $region41: #{tpu_custom_call.1} parent=1 // pred_fallthru
      _
    // Predicated region
    $region42: #{tpu_custom_call.1} parent=1 // pred_check
      _
    $region43: #{tpu_custom_call.1} parent=1 // pred_check_branch
      %152 = sbr.rel (0) target = $region45
    $region44: #{tpu_custom_call.1} parent=1 // pred_region
      %153 = dma.done [#allocation6], 16
    $region45: #{tpu_custom_call.1} parent=1 // pred_fallthru
      _
    %154 = vsyncpa [#allocation5], 1
    %155 = vsyncpa [#allocation8], 1
    %156 = vsyncpa [#allocation6], 1

</llo_original>
